<compile_context>
chip_gen: v5e
topology: v5e:2x2
jax: 0.10.0
libtpu: 0.0.40
codegen_flags: <defaults>
</compile_context>

<pallas_src>
import jax
import jax.numpy as jnp
from jax import lax
from jax.experimental import pallas as pl
from jax.experimental.pallas import tpu as pltpu


# --------------------------------------------------------------------------------------
# Kernel: one lane-dense GEMM tile + bias  (whole batch fused into the N dimension)
# --------------------------------------------------------------------------------------
def _conv_embed_kernel(p_ref, w_ref, b_ref, o_ref):
    # p_ref: (CKK_PAD, N_TILE)  w_ref: (C_out, CKK_PAD)  b_ref: (C_out, 1)
    # o_ref: (C_out, N_TILE)
    o_ref[...] = (jnp.dot(w_ref[...], p_ref[...],
                          preferred_element_type=jnp.float32)
                  + b_ref[...]).astype(o_ref.dtype)


# --------------------------------------------------------------------------------------
# Wrapper: pad + im2col (static XLA slices), single fused pallas_call, cheap transpose
# --------------------------------------------------------------------------------------
def conv_embedding_forward(x, weight, bias, *, stride, padding):
    B, C_in, H, W = x.shape
    C_out, C_in_w, KH, KW = weight.shape
    assert C_in_w == C_in
    OH = (H + 2 * padding - KH) // stride + 1
    OW = (W + 2 * padding - KW) // stride + 1
    CKK = C_in * KH * KW
    OHW = OH * OW
    NTOT = B * OHW

    # K padded to a multiple of 8 sublanes (27 -> 32 for 3x3x3); zeros are numerically free.
    CKK_PAD = ((CKK + 7) // 8) * 8
    # Lane-dense N tile: multiple of 128, capped at 1024; pad NTOT up to a tile multiple.
    N_TILE = min(1024, ((NTOT + 127) // 128) * 128)
    N_PAD = pl.cdiv(NTOT, N_TILE) * N_TILE
    num_tiles = N_PAD // N_TILE

    x_pad = jnp.pad(x, ((0, 0), (0, 0), (padding, padding), (padding, padding)))

    # im2col with row order (c major, then kh, kw) == torch weight.reshape(C_out, -1),
    # and column order (b major, then oh, ow) so the output reshapes to (C_out, B, OH, OW).
    slabs = [
        x_pad[:, :,
              kh:kh + stride * (OH - 1) + 1:stride,
              kw:kw + stride * (OW - 1) + 1:stride]            # (B, C_in, OH, OW)
        for kh in range(KH) for kw in range(KW)
    ]
    stacked = jnp.stack(slabs, axis=2)                         # (B, C_in, KH*KW, OH, OW)
    pat = jnp.transpose(stacked, (1, 2, 0, 3, 4)).reshape(CKK, NTOT)
    pat = jnp.pad(pat, ((0, CKK_PAD - CKK), (0, N_PAD - NTOT)))   # (CKK_PAD, N_PAD)

    w_mat = weight.reshape(C_out, CKK)
    w_mat = jnp.pad(w_mat, ((0, 0), (0, CKK_PAD - CKK)))          # (C_out, CKK_PAD)
    b_col = bias.reshape(C_out, 1)                                # (C_out, 1)

    cost = pl.CostEstimate(
        flops=2 * C_out * N_PAD * CKK_PAD,
        transcendentals=0,
        bytes_accessed=4 * (CKK_PAD * N_PAD + C_out * CKK_PAD + C_out + C_out * N_PAD),
    )

    out = pl.pallas_call(
        _conv_embed_kernel,
        grid=(num_tiles,),
        in_specs=[
            pl.BlockSpec((CKK_PAD, N_TILE), lambda n: (0, n)),    # patches, N-tiled
            pl.BlockSpec((C_out, CKK_PAD), lambda n: (0, 0)),     # weight, resident
            pl.BlockSpec((C_out, 1), lambda n: (0, 0)),           # bias, resident
        ],
        out_specs=pl.BlockSpec((C_out, N_TILE), lambda n: (0, n)),
        out_shape=jax.ShapeDtypeStruct((C_out, N_PAD), jnp.float32),
        compiler_params=pltpu.CompilerParams(
            dimension_semantics=("parallel",),
        ),
        cost_estimate=cost,
    )(pat, w_mat, b_col)

    out = out[:, :NTOT].reshape(C_out, B, OH, OW)
    return jnp.transpose(out, (1, 0, 2, 3))                      # (B, C_out, OH, OW)


# --------------------------------------------------------------------------------------
# Deterministic parameter init (matches nn.Conv2d default: U(-1/sqrt(fan_in), +))
# --------------------------------------------------------------------------------------
def init_params(key, in_channels, out_channels, patch_size):
    kw_, kb_ = jax.random.split(key)
    fan_in = in_channels * patch_size * patch_size
    bound = 1.0 / (fan_in ** 0.5)
    weight = jax.random.uniform(kw_, (out_channels, in_channels, patch_size, patch_size),
                                jnp.float32, -bound, bound)
    bias = jax.random.uniform(kb_, (out_channels,), jnp.float32, -bound, bound)
    return weight, bias


# --------------------------------------------------------------------------------------
# Pure-JAX reference (mirrors the PyTorch forward) for validation
# --------------------------------------------------------------------------------------
def reference_forward(x, weight, bias, *, stride, padding):
    out = lax.conv_general_dilated(
        x, weight,
        window_strides=(stride, stride),
        padding=((padding, padding), (padding, padding)),
        dimension_numbers=("NCHW", "OIHW", "NCHW"),
        precision=lax.Precision.HIGHEST,
    )
    return out + bias.reshape(1, -1, 1, 1)


if __name__ == "__main__":
    B, C_in, H, W = 2, 3, 16, 16
    C_out, patch_size, stride, padding = 64, 3, 2, 1

    key = jax.random.PRNGKey(0)
    kx, kp = jax.random.split(key)
    x = jax.random.normal(kx, (B, C_in, H, W), jnp.float32)
    weight, bias = init_params(kp, C_in, C_out, patch_size)

    out = conv_embedding_forward(x, weight, bias, stride=stride, padding=padding)
    out = jax.block_until_ready(out)

    ref = reference_forward(x, weight, bias, stride=stride, padding=padding)
    OH = (H + 2 * padding - patch_size) // stride + 1
    OW = (W + 2 * padding - patch_size) // stride + 1
    assert out.shape == (B, C_out, OH, OW), out.shape
    err = float(jnp.max(jnp.abs(out - ref)))
    assert err < 1e-3, f"max abs err {err}"
    print("KERNEL_OK")
</pallas_src>

<mosaic_0001>
module attributes {stable_mosaic.version = 11 : i64} {
  func.func @_conv_embed_kernel(%arg0: i32, %arg1: memref<32x128xf32, #tpu.memory_space<vmem>>, %arg2: memref<64x32xf32, #tpu.memory_space<vmem>>, %arg3: memref<64x1xf32, #tpu.memory_space<vmem>>, %arg4: memref<64x128xf32, #tpu.memory_space<vmem>>) attributes {dimension_semantics = [#tpu.dimension_semantics<parallel>], iteration_bounds = array<i64: 1>, scalar_prefetch = 0 : i64, scratch_operands = 0 : i64, tpu.core_type = #tpu.core_type<tc>, window_params = [{transform_indices = @transform_0, window_bounds = array<i64: 32, 128>}, {pipeline_mode = #tpu.pipeline_mode<synchronous>, transform_indices = @transform_1, window_bounds = array<i64: 64, 32>}, {pipeline_mode = #tpu.pipeline_mode<synchronous>, transform_indices = @transform_2, window_bounds = array<i64: 64, 1>}, {transform_indices = @transform_3, window_bounds = array<i64: 64, 128>}]} {
    %c0 = arith.constant 0 : index
    %c0_0 = arith.constant 0 : index
    %0 = vector.load %arg2[%c0, %c0_0] : memref<64x32xf32, #tpu.memory_space<vmem>>, vector<64x32xf32>
    %c0_1 = arith.constant 0 : index
    %c0_2 = arith.constant 0 : index
    %1 = vector.load %arg1[%c0_1, %c0_2] : memref<32x128xf32, #tpu.memory_space<vmem>>, vector<32x128xf32>
    %cst = arith.constant dense<0.000000e+00> : vector<64x128xf32>
    %2 = tpu.matmul %0, %1, %cst {dimension_numbers = #tpu.dot_dimension_numbers<[1], [0], [0], [1], [0, 0, 1, 1], [], []>} : vector<64x32xf32>, vector<32x128xf32>, vector<64x128xf32> -> vector<64x128xf32>
    %c0_3 = arith.constant 0 : index
    %c0_4 = arith.constant 0 : index
    %3 = vector.load %arg3[%c0_3, %c0_4] : memref<64x1xf32, #tpu.memory_space<vmem>>, vector<64x1xf32>
    %4 = vector.broadcast %3 : vector<64x1xf32> to vector<64x128xf32>
    %5 = arith.addf %2, %4 : vector<64x128xf32>
    %c0_5 = arith.constant 0 : index
    %c0_6 = arith.constant 0 : index
    %6 = vector.load %arg4[%c0_5, %c0_6] : memref<64x128xf32, #tpu.memory_space<vmem>>, vector<64x128xf32>
    tpu.vector_store %arg4[%c0_5, %c0_6], %5 {strides = array<i32>} : memref<64x128xf32, #tpu.memory_space<vmem>>, vector<64x128xf32>,
    return
  }
  func.func @transform_0(%arg0: i32) -> (i32, i32) {
    %c0_i32 = arith.constant 0 : i32
    %c0_i32_0 = arith.constant 0 : i32
    return %c0_i32, %arg0 : i32, i32
  }
  func.func @transform_1(%arg0: i32) -> (i32, i32) {
    %c0_i32 = arith.constant 0 : i32
    %c0_i32_0 = arith.constant 0 : i32
    %c0_i32_1 = arith.constant 0 : i32
    return %c0_i32, %c0_i32_0 : i32, i32
  }
  func.func @transform_2(%arg0: i32) -> (i32, i32) {
    %c0_i32 = arith.constant 0 : i32
    %c0_i32_0 = arith.constant 0 : i32
    %c0_i32_1 = arith.constant 0 : i32
    return %c0_i32, %c0_i32_0 : i32, i32
  }
  func.func @transform_3(%arg0: i32) -> (i32, i32) {
    %c0_i32 = arith.constant 0 : i32
    %c0_i32_0 = arith.constant 0 : i32
    return %c0_i32, %arg0 : i32, i32
  }
}

</mosaic_0001>

<llo_original>
// kernel: tpu_custom_call.1
$region0: #{tpu_custom_call.1}
  #allocation0 [shape = 'u32[]', space=smem, size = 0x4, offset = 0x4, fixed_abs, tag = 'smem constant byte address 0x4 - core index']
  #allocation1 [shape = 'u32[72,128]{1,0:T(1,128)}', space=vmem, size = 0x9000, scoped, tag = 'internal scratch']
  %s0 = inlined_call_operand.vmem [shape: f32[32,128], index: 0, kind: input, shape index: {}]
  %s1 = inlined_call_operand.vmem [shape: f32[64,32], index: 1, kind: input, shape index: {}]
  %s2 = inlined_call_operand.vmem [shape: f32[64,1], index: 2, kind: input, shape index: {}]
  %s3 = inlined_call_operand.hbm [shape: f32[64,128], index: 3, kind: output, shape index: {}]
  %s4 = sld [smem:[#allocation0]]
  $region22: #{tpu_custom_call.1} parent=0
    _
  %s6 = ssub.s32 1, %s4
  %s7 = scalar_select 0, %s6, %s4
  $region1: #{tpu_custom_call.1} parent=0
    #allocation2 [shape = 'u8[32768]{0}', space=vmem, size = 0x8000, scoped, tag = 'output window, operand 0, single buffered']
    #allocation3 [shape = 's32[1]{0}', space=sflag, size = 0x4, scoped, tag = 'scoped memory for tpu_custom_call.1']
    %8 = vsyncpa [#allocation3], 0
    // Predicated region
    $region2: #{tpu_custom_call.1} parent=1 // pred_check
      _
    $region3: #{tpu_custom_call.1} parent=1 // pred_check_branch
      %10 = sbr.rel (0) target = $region5
    $region4: #{tpu_custom_call.1} parent=1 // pred_region
      _
    $region5: #{tpu_custom_call.1} parent=1 // pred_fallthru
      _
    // Predicated region
    $region6: #{tpu_custom_call.1} parent=1 // pred_check
      _
    $region7: #{tpu_custom_call.1} parent=1 // pred_check_branch
      %12 = sbr.rel (0) target = $region9
    $region8: #{tpu_custom_call.1} parent=1 // pred_region
      _
    $region9: #{tpu_custom_call.1} parent=1 // pred_fallthru
      _
    // Predicated region
    $region10: #{tpu_custom_call.1} parent=1 // pred_check
      _
    $region11: #{tpu_custom_call.1} parent=1 // pred_check_branch
      %14 = sbr.rel (0) target = $region13
    $region12: #{tpu_custom_call.1} parent=1 // pred_region
      _
    $region13: #{tpu_custom_call.1} parent=1 // pred_fallthru
      _
    %v15 = vld [vmem:[%s1] sm:$0xff]
    %v16 = vld [vmem:[%s1 + $0x8] sm:$0xff]
    %v17 = vld [vmem:[%s1 + $0x10] sm:$0xff]
    %v18 = vld [vmem:[%s1 + $0x18] sm:$0xff]
    %v19 = vld [vmem:[%s1 + $0x20] sm:$0xff]
    %v20 = vld [vmem:[%s1 + $0x28] sm:$0xff]
    %v21 = vld [vmem:[%s1 + $0x30] sm:$0xff]
    %v22 = vld [vmem:[%s1 + $0x38] sm:$0xff]
    %v23 = vld [vmem:[%s0] sm:$0xff]
    %v24 = vld [vmem:[%s0 + $0x8] sm:$0xff]
    %v25 = vld [vmem:[%s0 + $0x10] sm:$0xff]
    %v26 = vld [vmem:[%s0 + $0x18] sm:$0xff]
    %v27 = vld [vmem:[%s2] sm:$0xff]
    %v28 = vld [vmem:[%s2 + $0x8] sm:$0xff]
    %v29 = vld [vmem:[%s2 + $0x10] sm:$0xff]
    %v30 = vld [vmem:[%s2 + $0x18] sm:$0xff]
    %v31 = vld [vmem:[%s2 + $0x20] sm:$0xff]
    %v32 = vld [vmem:[%s2 + $0x28] sm:$0xff]
    %v33 = vld [vmem:[%s2 + $0x30] sm:$0xff]
    %v34 = vld [vmem:[%s2 + $0x38] sm:$0xff]
    %36 = vset.pattern.permute.xlu0 0
    %37 = vperm.xlu0 %36, %v27
    %v38 = vpop.permute.xlu0 %37
    %41 = vset.pattern.permute.xlu0 0
    %42 = vperm.xlu0 %41, %v28
    %v43 = vpop.permute.xlu0 %42
    %46 = vset.pattern.permute.xlu0 0
    %47 = vperm.xlu0 %46, %v29
    %v48 = vpop.permute.xlu0 %47
    %51 = vset.pattern.permute.xlu0 0
    %52 = vperm.xlu0 %51, %v30
    %v53 = vpop.permute.xlu0 %52
    %56 = vset.pattern.permute.xlu0 0
    %57 = vperm.xlu0 %56, %v31
    %v58 = vpop.permute.xlu0 %57
    %61 = vset.pattern.permute.xlu0 0
    %62 = vperm.xlu0 %61, %v32
    %v63 = vpop.permute.xlu0 %62
    %66 = vset.pattern.permute.xlu0 0
    %67 = vperm.xlu0 %66, %v33
    %v68 = vpop.permute.xlu0 %67
    %71 = vset.pattern.permute.xlu0 0
    %72 = vperm.xlu0 %71, %v34
    %v73 = vpop.permute.xlu0 %72
    %vm75 = vcmask 261120
    %v77 = vsel %vm75, %v15, 0
    %v80 = vsel %vm75, %v16, 0
    %v83 = vsel %vm75, %v17, 0
    %v86 = vsel %vm75, %v18, 0
    %v89 = vsel %vm75, %v19, 0
    %v92 = vsel %vm75, %v20, 0
    %v95 = vsel %vm75, %v21, 0
    %v98 = vsel %vm75, %v22, 0
    %100 = vmatpush.msra.mxu0 0.0
    %101 = vmatpush.msra.mxu0 0.0
    %102 = vmatpush.msra.mxu0 0.0
    %103 = vmatpush.msra.mxu0 0.0
    %104 = vmatpush.msra.mxu0 0.0
    %105 = vmatpush.msra.mxu0 0.0
    %106 = vmatpush.msra.mxu0 0.0
    %107 = vmatpush.msra.mxu0 0.0
    %108 = vmatpush.msra.mxu0 0.0
    %109 = vmatpush.msra.mxu0 0.0
    %110 = vmatpush.msra.mxu0 0.0
    %111 = vmatpush.msra.mxu0 0.0
    %112 = vmatpush.msra.mxu0 %v26
    %113 = vmatpush.msra.mxu0 %v25
    %114 = vmatpush.msra.mxu0 %v24
    %115 = vmatpush.msra.mxu0 %v23
    %116 = vmatmul.f32.gmra.mxu0 %v77
    %v117 = vpop.f32.mrf.mxu0
    %v118 = vadd.f32 %v38, %v117
    %119 = vmatmul.f32.gmra.mxu0 %v80
    %v120 = vpop.f32.mrf.mxu0
    %v121 = vadd.f32 %v43, %v120
    %122 = vmatmul.f32.gmra.mxu0 %v83
    %v123 = vpop.f32.mrf.mxu0
    %v124 = vadd.f32 %v48, %v123
    %125 = vmatmul.f32.gmra.mxu0 %v86
    %v126 = vpop.f32.mrf.mxu0
    %v127 = vadd.f32 %v53, %v126
    %128 = vmatmul.f32.gmra.mxu0 %v89
    %v129 = vpop.f32.mrf.mxu0
    %v130 = vadd.f32 %v58, %v129
    %131 = vmatmul.f32.gmra.mxu0 %v92
    %v132 = vpop.f32.mrf.mxu0
    %v133 = vadd.f32 %v63, %v132
    %134 = vmatmul.f32.gmra.mxu0 %v95
    %v135 = vpop.f32.mrf.mxu0
    %v136 = vadd.f32 %v68, %v135
    %137 = vmatmul.f32.gmra.mxu0 %v98
    %v138 = vpop.f32.mrf.mxu0
    %v139 = vadd.f32 %v73, %v138
    %140 = vdwg.mxu0
    %141 = vst [vmem:[#allocation2] sm:$0xff] %v118
    %142 = vst [vmem:[#allocation2 + $0x8] sm:$0xff] %v121
    %143 = vst [vmem:[#allocation2 + $0x10] sm:$0xff] %v124
    %144 = vst [vmem:[#allocation2 + $0x18] sm:$0xff] %v127
    %145 = vst [vmem:[#allocation2 + $0x20] sm:$0xff] %v130
    %146 = vst [vmem:[#allocation2 + $0x28] sm:$0xff] %v133
    %147 = vst [vmem:[#allocation2 + $0x30] sm:$0xff] %v136
    %148 = vst [vmem:[#allocation2 + $0x38] sm:$0xff] %v139
    // Predicated region
    $region14: #{tpu_custom_call.1} parent=1 // pred_check
      _
    $region15: #{tpu_custom_call.1} parent=1 // pred_check_branch
      %150 = sbr.rel (0) target = $region17
    $region16: #{tpu_custom_call.1} parent=1 // pred_region
      %152 = vsyncadd [#allocation3], 0
      %s153 = sshll.u32 [#allocation2], 4
      %s154 = int_to_ptr.vmem [resolvable:$true] %s153
      %s155 = sshll.u32 %s3, 4
      %s156 = int_to_ptr.hbm [resolvable:$true] %s155
      %161 = dma.vmem_to_hbm [thread:$0]  %s154, 1024, %s156, [#allocation3], 128, 128, 8
    $region17: #{tpu_custom_call.1} parent=1 // pred_fallthru
      _
    // Predicated region
    $region18: #{tpu_custom_call.1} parent=1 // pred_check
      _
    $region19: #{tpu_custom_call.1} parent=1 // pred_check_branch
      %163 = sbr.rel (0) target = $region21
    $region20: #{tpu_custom_call.1} parent=1 // pred_region
      %165 = dma.done [#allocation3], 1024
    $region21: #{tpu_custom_call.1} parent=1 // pred_fallthru
      _
    %166 = vsyncpa [#allocation3], 1

</llo_original>
